<compile_context>
chip_gen: v6e
topology: v6e:2x2x1
jax: 0.10.0
libtpu: 0.0.40
codegen_flags: <defaults>
</compile_context>

<pallas_src>
import functools

import jax
import jax.numpy as jnp
from jax import lax
from jax.experimental import pallas as pl
from jax.experimental.pallas import tpu as pltpu


def _pick_tile(dim, candidates):
    """Largest candidate tile that divides `dim`, else the full dim."""
    for c in candidates:
        if dim % c == 0:
            return c
    return dim


# ---------------------------------------------------------------------------
# Tiled linear: y = x @ W + b
# ---------------------------------------------------------------------------
def _linear_kernel(x_ref, w_ref, b_ref, o_ref):
    # x: (tm, K), w: (K, tn), b: (1, tn) -> o: (tm, tn); accumulate in f32 on the MXU.
    acc = jnp.dot(x_ref[...], w_ref[...], preferred_element_type=jnp.float32)
    o_ref[...] = (acc + b_ref[...].astype(jnp.float32)).astype(o_ref.dtype)


def linear(x2d, w, b, *, tile_candidates=(512, 256, 128)):
    """x2d: (M, K), w: (K, N), b: (N,) -> (M, N). Tiled over M and N."""
    M, K = x2d.shape
    N = w.shape[1]
    tm = _pick_tile(M, tile_candidates)
    tn = _pick_tile(N, tile_candidates)
    grid = (M // tm, N // tn)
    # TODO(synk): for very large K add a K-reduction grid axis (last, "arbitrary")
    # with an f32 VMEM accumulator and pl.when init/flush.
    return pl.pallas_call(
        _linear_kernel,
        out_shape=jax.ShapeDtypeStruct((M, N), x2d.dtype),
        grid_spec=pltpu.PrefetchScalarGridSpec(
            num_scalar_prefetch=0,
            grid=grid,
            in_specs=[
                pl.BlockSpec((tm, K), lambda i, j: (i, 0)),
                pl.BlockSpec((K, tn), lambda i, j: (0, j)),
                pl.BlockSpec((1, tn), lambda i, j: (0, j)),
            ],
            out_specs=pl.BlockSpec((tm, tn), lambda i, j: (i, j)),
        ),
        compiler_params=pltpu.CompilerParams(
            dimension_semantics=("parallel", "parallel"),
        ),
    )(x2d, w, b.reshape(1, N))


# ---------------------------------------------------------------------------
# Flash-style causal attention
#   qkv5: (B, T, 3, H, hd)  with the "3" axis ordered [Q | K | V] (all heads each)
#   out : (B, T, H, hd)
# ---------------------------------------------------------------------------
def _flash_attn_kernel(q_ref, k_ref, v_ref, o_ref, m_sc, l_sc, acc_sc,
                       *, H, hd, tq, tk, scale):
    q_idx = pl.program_id(1)
    kv_idx = pl.program_id(2)
    n_kv = pl.num_programs(2)

    @pl.when(kv_idx == 0)
    def _init():
        m_sc[...] = jnp.full(m_sc.shape, -jnp.inf, m_sc.dtype)
        l_sc[...] = jnp.zeros(l_sc.shape, l_sc.dtype)
        acc_sc[...] = jnp.zeros(acc_sc.shape, acc_sc.dtype)

    def update(mask):
        for h in range(H):
            # Scale folded into q: O(tq*hd) multiplies instead of O(tq*tk) on scores.
            q = q_ref[0, :, 0, h, :] * scale          # (tq, hd), native dtype
            k = k_ref[0, :, 0, h, :]                  # (tk, hd)
            v = v_ref[0, :, 0, h, :]                  # (tk, hd)
            # QK^T: contract last dims directly (no k.T materialization).
            s = lax.dot_general(
                q, k, (((1,), (1,)), ((), ())),
                preferred_element_type=jnp.float32)   # (tq, tk) f32
            if mask is not None:
                s = jnp.where(mask, s, -jnp.inf)
            m_prev = m_sc[h]                          # (tq, 1)
            m_new = jnp.maximum(m_prev, jnp.max(s, axis=-1, keepdims=True))
            alpha = jnp.exp(m_prev - m_new)
            p = jnp.exp(s - m_new)
            l_sc[h] = alpha * l_sc[h] + jnp.sum(p, axis=-1, keepdims=True)
            acc_sc[h] = alpha * acc_sc[h] + jnp.dot(
                p.astype(v.dtype), v, preferred_element_type=jnp.float32)
            m_sc[h] = m_new

    # Strictly-below-diagonal KV tiles are fully unmasked (tq == tk, tile-aligned).
    @pl.when(kv_idx < q_idx)
    def _full_tiles():
        update(mask=None)

    # Diagonal tile: tile-local causal mask (no full T x T iotas).
    @pl.when(kv_idx == q_idx)
    def _diag_tile():
        row = lax.broadcasted_iota(jnp.int32, (tq, tk), 0)
        col = lax.broadcasted_iota(jnp.int32, (tq, tk), 1)
        update(mask=col <= row)

    # KV tiles with kv_idx > q_idx are fully masked -> skipped entirely.

    @pl.when(kv_idx == n_kv - 1)
    def _finalize():
        for h in range(H):
            inv_l = pl.reciprocal(l_sc[h], approx=True)   # EUP vrcp, off the VPU path
            o_ref[0, :, h, :] = (acc_sc[h] * inv_l).astype(o_ref.dtype)


def causal_flash_attention(qkv5, head_dim, *, tile_candidates=(256, 128)):
    """qkv5: (B, T, 3, H, hd) [Q|K|V-major] -> (B, T, H, hd) causal attention.

    Tile candidates default to 256 (fits v7x's 64 MiB VMEM; matches the 2x256^2 MXU
    on v6e/v7x).
    """
    B, T, three, H, hd = qkv5.shape
    assert three == 3 and hd == head_dim
    scale = float(hd) ** -0.5
    tq = _pick_tile(T, tile_candidates)
    tk = tq  # keep equal so diagonal-tile mask / tile-skip logic is exact
    grid = (B, T // tq, T // tk)

    kernel = functools.partial(
        _flash_attn_kernel, H=H, hd=hd, tq=tq, tk=tk, scale=scale)

    # Separate Q / K / V streams: each fetches exactly the bytes it needs.
    q_spec = pl.BlockSpec((1, tq, 1, H, hd), lambda b, qi, ki: (b, qi, 0, 0, 0))
    k_spec = pl.BlockSpec((1, tk, 1, H, hd), lambda b, qi, ki: (b, ki, 1, 0, 0))
    v_spec = pl.BlockSpec((1, tk, 1, H, hd), lambda b, qi, ki: (b, ki, 2, 0, 0))
    out_spec = pl.BlockSpec((1, tq, H, hd), lambda b, qi, ki: (b, qi, 0, 0))

    return pl.pallas_call(
        kernel,
        out_shape=jax.ShapeDtypeStruct((B, T, H, hd), qkv5.dtype),
        grid_spec=pltpu.PrefetchScalarGridSpec(
            num_scalar_prefetch=0,
            grid=grid,
            in_specs=[q_spec, k_spec, v_spec],
            out_specs=out_spec,
            scratch_shapes=[
                pltpu.VMEM((H, tq, 1), jnp.float32),    # running max m
                pltpu.VMEM((H, tq, 1), jnp.float32),    # running sum l
                pltpu.VMEM((H, tq, hd), jnp.float32),   # output accumulator
            ],
        ),
        compiler_params=pltpu.CompilerParams(
            dimension_semantics=("parallel", "parallel", "arbitrary"),
        ),
    )(qkv5, qkv5, qkv5)


# ---------------------------------------------------------------------------
# MultiHeadAttention forward (matches the PyTorch module's math)
# ---------------------------------------------------------------------------
def multi_head_attention(x, params, cfg):
    B, T, E = x.shape
    H = cfg["n_heads"]
    hd = E // H

    # One-time column permutation of the fused QKV weight/bias: per-head [Q|K|V]
    # interleave -> [Q(all heads) | K(all heads) | V(all heads)].  This tiny (E,3E)
    # shuffle lives on the weights (never the activation) and makes the attention
    # kernel's Q/K/V DMA streams exact (no overfetch) with zero activation transposes.
    w_attn = params["w_attn"].reshape(E, H, 3, hd).transpose(0, 2, 1, 3).reshape(E, 3 * E)
    b_attn = params["b_attn"].reshape(H, 3, hd).transpose(1, 0, 2).reshape(3 * E)

    # Fused QKV projection (tiled Pallas linear).
    qkv = linear(x.reshape(B * T, E), w_attn, b_attn)      # (B*T, 3E), [Q|K|V]-major

    # Free reshape; the head split happens inside the attention kernel via BlockSpec
    # slicing -> no XLA transpose of the activation.
    qkv5 = qkv.reshape(B, T, 3, H, hd)

    # Flash-style causal attention; output lands directly in (B, T, H, hd) layout.
    out = causal_flash_attention(qkv5, hd)                  # (B, T, H, hd)

    # Free (contiguous) reshape to (B*T, E) and output projection.
    out = linear(out.reshape(B * T, E), params["w_out"], params["b_out"])
    return out.reshape(B, T, E)


# ---------------------------------------------------------------------------
# Pure-JAX reference for validation (PyTorch convention: per-head [Q|K|V])
# ---------------------------------------------------------------------------
def reference(x, params, cfg):
    B, T, E = x.shape
    H = cfg["n_heads"]
    hd = E // H
    qkv = x @ params["w_attn"] + params["b_attn"]
    qkv = qkv.reshape(B, T, H, 3 * hd).transpose(0, 2, 1, 3)
    Q, K, V = qkv[..., :hd], qkv[..., hd:2 * hd], qkv[..., 2 * hd:]
    s = jnp.einsum("bhqd,bhkd->bhqk", Q, K) * (hd ** -0.5)
    mask = jnp.tril(jnp.ones((T, T), dtype=bool))
    s = jnp.where(mask[None, None], s, -jnp.inf)
    p = jax.nn.softmax(s, axis=-1)
    out = jnp.einsum("bhqk,bhkd->bhqd", p, V)
    out = out.transpose(0, 2, 1, 3).reshape(B, T, E)
    return out @ params["w_out"] + params["b_out"]


if __name__ == "__main__":
    cfg = {
        "emb_dim": 32,
        "n_heads": 4,
        "drop_rate": 0.0,
        "context_length": 8,
        "qkv_bias": True,
        "flash": False,
    }
    B, T, E = 2, 8, cfg["emb_dim"]

    key = jax.random.PRNGKey(0)
    kx, kw1, kb1, kw2, kb2 = jax.random.split(key, 5)
    x = jax.random.normal(kx, (B, T, E), dtype=jnp.float32)
    params = {
        "w_attn": jax.random.normal(kw1, (E, 3 * E), dtype=jnp.float32) * 0.05,
        "b_attn": jax.random.normal(kb1, (3 * E,), dtype=jnp.float32) * 0.05,
        "w_out": jax.random.normal(kw2, (E, E), dtype=jnp.float32) * 0.05,
        "b_out": jax.random.normal(kb2, (E,), dtype=jnp.float32) * 0.05,
    }

    out = multi_head_attention(x, params, cfg)
    out = jax.block_until_ready(out)

    ref = reference(x, params, cfg)
    assert out.shape == (B, T, E)
    # Slightly looser tolerance: approx=True reciprocal (EUP vrcp) in the finalize step.
    assert jnp.allclose(out, ref, atol=2e-3, rtol=2e-3), "mismatch vs reference"
    print("KERNEL_OK")
</pallas_src>

<mosaic_0001>
module attributes {stable_mosaic.version = 11 : i64} {
  func.func @_linear_kernel(%arg0: i32, %arg1: i32, %arg2: memref<16x32xf32, #tpu.memory_space<vmem>>, %arg3: memref<32x96xf32, #tpu.memory_space<vmem>>, %arg4: memref<1x96xf32, #tpu.memory_space<vmem>>, %arg5: memref<16x96xf32, #tpu.memory_space<vmem>>) attributes {dimension_semantics = [#tpu.dimension_semantics<parallel>, #tpu.dimension_semantics<parallel>], iteration_bounds = array<i64: 1, 1>, scalar_prefetch = 0 : i64, scratch_operands = 0 : i64, tpu.core_type = #tpu.core_type<tc>, window_params = [{transform_indices = @transform_0, window_bounds = array<i64: 16, 32>}, {transform_indices = @transform_1, window_bounds = array<i64: 32, 96>}, {transform_indices = @transform_2, window_bounds = array<i64: 1, 96>}, {transform_indices = @transform_3, window_bounds = array<i64: 16, 96>}]} {
    %c0 = arith.constant 0 : index
    %c0_0 = arith.constant 0 : index
    %0 = vector.load %arg2[%c0, %c0_0] : memref<16x32xf32, #tpu.memory_space<vmem>>, vector<16x32xf32>
    %c0_1 = arith.constant 0 : index
    %c0_2 = arith.constant 0 : index
    %1 = vector.load %arg3[%c0_1, %c0_2] : memref<32x96xf32, #tpu.memory_space<vmem>>, vector<32x96xf32>
    %cst = arith.constant dense<0.000000e+00> : vector<16x96xf32>
    %2 = tpu.matmul %0, %1, %cst {dimension_numbers = #tpu.dot_dimension_numbers<[1], [0], [0], [1], [0, 0, 1, 1], [], []>} : vector<16x32xf32>, vector<32x96xf32>, vector<16x96xf32> -> vector<16x96xf32>
    %c0_3 = arith.constant 0 : index
    %c0_4 = arith.constant 0 : index
    %3 = vector.load %arg4[%c0_3, %c0_4] : memref<1x96xf32, #tpu.memory_space<vmem>>, vector<1x96xf32>
    %4 = vector.broadcast %3 : vector<1x96xf32> to vector<16x96xf32>
    %5 = arith.addf %2, %4 : vector<16x96xf32>
    %c0_5 = arith.constant 0 : index
    %c0_6 = arith.constant 0 : index
    %6 = vector.load %arg5[%c0_5, %c0_6] : memref<16x96xf32, #tpu.memory_space<vmem>>, vector<16x96xf32>
    tpu.vector_store %arg5[%c0_5, %c0_6], %5 {strides = array<i32>} : memref<16x96xf32, #tpu.memory_space<vmem>>, vector<16x96xf32>,
    return
  }
  func.func @transform_0(%arg0: i32, %arg1: i32) -> (i32, i32) {
    %c0_i32 = arith.constant 0 : i32
    %c0_i32_0 = arith.constant 0 : i32
    return %arg0, %c0_i32 : i32, i32
  }
  func.func @transform_1(%arg0: i32, %arg1: i32) -> (i32, i32) {
    %c0_i32 = arith.constant 0 : i32
    %c0_i32_0 = arith.constant 0 : i32
    return %c0_i32, %arg1 : i32, i32
  }
  func.func @transform_2(%arg0: i32, %arg1: i32) -> (i32, i32) {
    %c0_i32 = arith.constant 0 : i32
    %c0_i32_0 = arith.constant 0 : i32
    return %c0_i32, %arg1 : i32, i32
  }
  func.func @transform_3(%arg0: i32, %arg1: i32) -> (i32, i32) {
    %c0_i32 = arith.constant 0 : i32
    return %arg0, %arg1 : i32, i32
  }
}

</mosaic_0001>

<llo_original>
// kernel: tpu_custom_call.1
$region0: #{tpu_custom_call.1}
  #allocation0 [shape = 'u32[]', space=smem, size = 0x4, offset = 0x4, fixed_abs, tag = 'smem constant byte address 0x4 - core index']
  #allocation1 [shape = 'u32[144,128]{1,0:T(1,128)}', space=vmem, size = 0x12000, scoped, tag = 'internal scratch']
  %s0 = inlined_call_operand.hbm [shape: f32[16,32], index: 0, kind: input, shape index: {}]
  %s1 = inlined_call_operand.hbm [shape: f32[32,96], index: 1, kind: input, shape index: {}]
  %s2 = inlined_call_operand.vmem [shape: f32[1,96], index: 2, kind: input, shape index: {}]
  %s3 = inlined_call_operand.hbm [shape: f32[16,96], index: 3, kind: output, shape index: {}]
  %s4 = sld [smem:[#allocation0]]
  $region30: #{tpu_custom_call.1} parent=0
    _
  %s6 = ssub.s32 1, %s4
  %s7 = scalar_select 0, %s6, %s4
  $region1: #{tpu_custom_call.1} parent=0
    #allocation2 [shape = 'u8[8192]{0}', space=vmem, size = 0x2000, scoped, tag = 'input window, operand 0, single buffered']
    #allocation3 [shape = 's32[1]{0}', space=sflag, size = 0x4, scoped, tag = 'scoped memory for tpu_custom_call.1']
    #allocation4 [shape = 's32[1]{0}', space=sflag, size = 0x4, scoped, tag = 'scoped memory for tpu_custom_call.1']
    #allocation5 [shape = 'u8[16384]{0}', space=vmem, size = 0x4000, scoped, tag = 'input window, operand 1, single buffered']
    #allocation6 [shape = 's32[1]{0}', space=sflag, size = 0x4, scoped, tag = 'scoped memory for tpu_custom_call.1']
    #allocation7 [shape = 'u8[8192]{0}', space=vmem, size = 0x2000, scoped, tag = 'output window, operand 0, single buffered']
    %8 = vsyncpa [#allocation3], 0
    %9 = vsyncpa [#allocation6], 0
    %10 = vsyncpa [#allocation4], 0
    // Predicated region
    $region2: #{tpu_custom_call.1} parent=1 // pred_check
      _
    $region3: #{tpu_custom_call.1} parent=1 // pred_check_branch
      %12 = sbr.rel (0) target = $region5
    $region4: #{tpu_custom_call.1} parent=1 // pred_region
      %s14 = ssub.s32 256, 256
      %15 = vsyncadd [#allocation3], %s14
      %s16 = sshll.u32 [#allocation2], 4
      %s17 = int_to_ptr.vmem [resolvable:$true] %s16
      %22 = dma.hbm_to_vmem [thread:$0]  %s0, 256, %s17, [#allocation3], 128, 128, 8
    $region5: #{tpu_custom_call.1} parent=1 // pred_fallthru
      _
    // Predicated region
    $region6: #{tpu_custom_call.1} parent=1 // pred_check
      _
    $region7: #{tpu_custom_call.1} parent=1 // pred_check_branch
      %24 = sbr.rel (0) target = $region9
    $region8: #{tpu_custom_call.1} parent=1 // pred_region
      %s26 = ssub.s32 512, 512
      %27 = vsyncadd [#allocation6], %s26
      %s28 = sshll.u32 [#allocation5], 4
      %s29 = int_to_ptr.vmem [resolvable:$true] %s28
      %34 = dma.hbm_to_vmem [thread:$0]  %s1, 512, %s29, [#allocation6], 128, 128, 8
    $region9: #{tpu_custom_call.1} parent=1 // pred_fallthru
      _
    // Predicated region
    $region10: #{tpu_custom_call.1} parent=1 // pred_check
      _
    $region11: #{tpu_custom_call.1} parent=1 // pred_check_branch
      %36 = sbr.rel (0) target = $region13
    $region12: #{tpu_custom_call.1} parent=1 // pred_region
      _
    $region13: #{tpu_custom_call.1} parent=1 // pred_fallthru
      _
    // Predicated region
    $region14: #{tpu_custom_call.1} parent=1 // pred_check
      _
    $region15: #{tpu_custom_call.1} parent=1 // pred_check_branch
      %38 = sbr.rel (0) target = $region17
    $region16: #{tpu_custom_call.1} parent=1 // pred_region
      %39 = dma.done [#allocation3], 256
    $region17: #{tpu_custom_call.1} parent=1 // pred_fallthru
      _
    // Predicated region
    $region18: #{tpu_custom_call.1} parent=1 // pred_check
      _
    $region19: #{tpu_custom_call.1} parent=1 // pred_check_branch
      %41 = sbr.rel (0) target = $region21
    $region20: #{tpu_custom_call.1} parent=1 // pred_region
      %42 = dma.done [#allocation6], 512
    $region21: #{tpu_custom_call.1} parent=1 // pred_fallthru
      _
    %v43 = vld [vmem:[#allocation2] sm:$0xff]
    %v44 = vld [vmem:[#allocation2 + $0x8] sm:$0xff]
    %v45 = vld [vmem:[#allocation5] sm:$0xff]
    %v46 = vld [vmem:[#allocation5 + $0x8] sm:$0xff]
    %v47 = vld [vmem:[#allocation5 + $0x10] sm:$0xff]
    %v48 = vld [vmem:[#allocation5 + $0x18] sm:$0xff]
    %v49 = vld [vmem:[%s2] sm:$0x1]
    %v51 = vlaneseq
    %v52 = vshrl.u32 %v51, 7
    %v53 = vsub.s32 0, %v52
    %v54 = vrot.slane %v49, %v53
    %vm56 = vcmask 261120
    %v58 = vsel %vm56, %v43, 0
    %v61 = vsel %vm56, %v44, 0
    %63 = vmatprep.subr.mxu0 0.0
    %64 = vmatpush1.msra.mxu0 0.0
    %65 = vmatprep.subr.mxu0 0.0
    %66 = vmatpush1.msra.mxu0 0.0
    %67 = vmatprep.subr.mxu0 0.0
    %68 = vmatpush1.msra.mxu0 0.0
    %69 = vmatprep.subr.mxu0 0.0
    %70 = vmatpush1.msra.mxu0 0.0
    %71 = vmatprep.subr.mxu0 0.0
    %72 = vmatpush1.msra.mxu0 0.0
    %73 = vmatprep.subr.mxu0 0.0
    %74 = vmatpush1.msra.mxu0 0.0
    %75 = vmatprep.subr.mxu0 0.0
    %76 = vmatpush1.msra.mxu0 0.0
    %77 = vmatprep.subr.mxu0 0.0
    %78 = vmatpush1.msra.mxu0 0.0
    %79 = vmatprep.subr.mxu0 0.0
    %80 = vmatpush1.msra.mxu0 0.0
    %81 = vmatprep.subr.mxu0 0.0
    %82 = vmatpush1.msra.mxu0 0.0
    %83 = vmatprep.subr.mxu0 0.0
    %84 = vmatpush1.msra.mxu0 0.0
    %85 = vmatprep.subr.mxu0 0.0
    %86 = vmatpush1.msra.mxu0 0.0
    %87 = vmatprep.subr.mxu0 0.0
    %88 = vmatpush1.msra.mxu0 %v48
    %89 = vmatprep.subr.mxu0 0.0
    %90 = vmatpush1.msra.mxu0 %v47
    %91 = vmatprep.subr.mxu0 0.0
    %92 = vmatpush1.msra.mxu0 %v46
    %93 = vmatprep.subr.mxu0 0.0
    %94 = vmatpush1.msra.mxu0 %v45
    %95 = vmatprep.subr.mxu0 0.0
    %96 = vmatpush2.msra.mxu0 0.0
    %97 = vmatprep.subr.mxu0 0.0
    %98 = vmatpush2.msra.mxu0 0.0
    %99 = vmatprep.subr.mxu0 0.0
    %100 = vmatpush2.msra.mxu0 0.0
    %101 = vmatprep.subr.mxu0 0.0
    %102 = vmatpush2.msra.mxu0 0.0
    %103 = vmatprep.subr.mxu0 0.0
    %104 = vmatpush2.msra.mxu0 0.0
    %105 = vmatprep.subr.mxu0 0.0
    %106 = vmatpush2.msra.mxu0 0.0
    %107 = vmatprep.subr.mxu0 0.0
    %108 = vmatpush2.msra.mxu0 0.0
    %109 = vmatprep.subr.mxu0 0.0
    %110 = vmatpush2.msra.mxu0 0.0
    %111 = vmatprep.subr.mxu0 0.0
    %112 = vmatpush2.msra.mxu0 0.0
    %113 = vmatprep.subr.mxu0 0.0
    %114 = vmatpush2.msra.mxu0 0.0
    %115 = vmatprep.subr.mxu0 0.0
    %116 = vmatpush2.msra.mxu0 0.0
    %117 = vmatprep.subr.mxu0 0.0
    %118 = vmatpush2.msra.mxu0 0.0
    %119 = vmatprep.subr.mxu0 0.0
    %120 = vmatpush2.msra.mxu0 0.0
    %121 = vmatprep.subr.mxu0 0.0
    %122 = vmatpush2.msra.mxu0 0.0
    %123 = vmatprep.subr.mxu0 0.0
    %124 = vmatpush2.msra.mxu0 0.0
    %125 = vmatprep.subr.mxu0 0.0
    %126 = vmatpush2.msra.mxu0 0.0
    %127 = vmatprep.mubr.f32.mxu0 0.0
    %128 = vmatmul.mubr.f32.gmra.mxu0 %v58
    %v129 = vpop.f32.mrf.mxu0
    %v130 = vadd.f32 %v54, %v129
    %v131 = vpop.f32.mrf.mxu0
    %132 = vmatprep.mubr.f32.mxu0 0.0
    %133 = vmatmul.mubr.f32.gmra.mxu0 %v61
    %v134 = vpop.f32.mrf.mxu0
    %v135 = vadd.f32 %v54, %v134
    %v136 = vpop.f32.mrf.mxu0
    %137 = vdwg.mxu0
    %vm138 = vcmask 785408
    %139 = vst.msk [vmem:[#allocation7] sm:$0xff] %vm138, %v130
    %140 = vst.msk [vmem:[#allocation7 + $0x8] sm:$0xff] %vm138, %v135
    // Predicated region
    $region22: #{tpu_custom_call.1} parent=1 // pred_check
      _
    $region23: #{tpu_custom_call.1} parent=1 // pred_check_branch
      %142 = sbr.rel (0) target = $region25
    $region24: #{tpu_custom_call.1} parent=1 // pred_region
      %s144 = ssub.s32 256, 256
      %145 = vsyncadd [#allocation4], %s144
      %s146 = sshll.u32 [#allocation7], 4
      %s147 = int_to_ptr.vmem [resolvable:$true] %s146
      %152 = dma.vmem_to_hbm [thread:$0]  %s147, 256, %s3, [#allocation4], 128, 128, 8
    $region25: #{tpu_custom_call.1} parent=1 // pred_fallthru
      _
    // Predicated region
    $region26: #{tpu_custom_call.1} parent=1 // pred_check
      _
    $region27: #{tpu_custom_call.1} parent=1 // pred_check_branch
      %154 = sbr.rel (0) target = $region29
    $region28: #{tpu_custom_call.1} parent=1 // pred_region
      %155 = dma.done [#allocation4], 256
    $region29: #{tpu_custom_call.1} parent=1 // pred_fallthru
      _
    %156 = vsyncpa [#allocation3], 1
    %157 = vsyncpa [#allocation6], 1
    %158 = vsyncpa [#allocation4], 1

</llo_original>
